<compile_context>
chip_gen: v5e
topology: v5e:2x2
jax: 0.10.0
libtpu: 0.0.40
codegen_flags: <defaults>
</compile_context>

<pallas_src>
import functools

import jax
import jax.numpy as jnp
import numpy as np
from jax import lax
from jax.experimental import pallas as pl
from jax.experimental.pallas import tpu as pltpu


def _anti_pattern_kernel(logits_ref, out_ref, m_ref, idx_ref, d_ref, *,
                         ngram_size, repetition_penalty, v_tile, vocab_pad):
    v = pl.program_id(1)
    nv = pl.num_programs(1)

    # ---- init running stats on the first vocab tile of each batch row -------
    @pl.when(v == 0)
    def _():
        m_ref[...] = jnp.full_like(m_ref, jnp.finfo(jnp.float32).min)
        d_ref[...] = jnp.zeros_like(d_ref)
        idx_ref[...] = jnp.zeros_like(idx_ref)

    x = logits_ref[...].astype(jnp.float32)                  # [T, tv]
    T = x.shape[0]

    # ---- fused online max / argmax / rescaled sum-of-exp over vocab tiles ---
    col = lax.broadcasted_iota(jnp.int32, x.shape, 1) + v * v_tile
    mx_t = jnp.max(x, axis=-1, keepdims=True)                             # [T,1]
    idx_t = jnp.min(jnp.where(x == mx_t, col, jnp.int32(vocab_pad)),
                    axis=-1, keepdims=True)                               # [T,1]
    s_t = jnp.sum(jnp.exp(x - mx_t), axis=-1, keepdims=True)              # [T,1]

    m_old = m_ref[...]
    m_new = jnp.maximum(m_old, mx_t)
    # strict '>' keeps the earlier (smaller) index on exact cross-tile ties,
    # matching first-max-index argmax.
    idx_ref[...] = jnp.where(mx_t > m_old, idx_t, idx_ref[...])
    d_ref[...] = d_ref[...] * jnp.exp(m_old - m_new) + s_t * jnp.exp(mx_t - m_new)
    m_ref[...] = m_new

    # ---- pairwise n-gram stage, only after the whole vocab has been scanned -
    @pl.when(v == nv - 1)
    def _():
        n = ngram_size
        Tn = T - n + 1
        p_max = 1.0 / d_ref[...]        # softmax prob of the argmax token, [T,1]
        pred_c = idx_ref[...]           # [T,1] int32 predicted token ids

        # [T,1] -> [1,T] re-layout: lane broadcast + (T,128) XLU transpose +
        # row slice.  O(128*T) data movement instead of the old O(T^2)
        # diagonal-extract; no [T,T] temporaries, no MXU.
        pred_b = jnp.broadcast_to(pred_c, (T, 128))
        pred_r = jnp.transpose(pred_b)[0:1, :]               # [1, T] int32

        # n-gram equality from n shifted broadcast compares (int32, VPU only).
        ng = None
        for k in range(n):
            eq_k = pred_c[k:k + Tn, :] == pred_r[:, k:k + Tn]  # [Tn,Tn] bool
            ng = eq_k if ng is None else jnp.logical_and(ng, eq_k)

        # mean argmax-token prob of the n-gram starting at each position
        pa = p_max[0:Tn, :]
        for k in range(1, n):
            pa = pa + p_max[k:k + Tn, :]
        pa = pa * jnp.float32(1.0 / n)                        # [Tn, 1]

        # By symmetry of ng, the sum over pairs (t, t2>=t+n) of pa[t2] equals a
        # row-weighted count with the swapped triangular mask i >= j + n.
        # Triangular mask from a single broadcast compare of two small iotas;
        # fold it into the boolean and reduce directly (no float mask matrix).
        ri = lax.broadcasted_iota(jnp.int32, (Tn, 1), 0)
        ci = lax.broadcasted_iota(jnp.int32, (1, Tn), 1)
        valid = jnp.logical_and(ng, ri >= ci + n)             # [Tn, Tn] bool
        w = jnp.sum(valid.astype(jnp.float32), axis=1, keepdims=True)   # [Tn,1]
        contrib = jnp.sum(w * pa, axis=0, keepdims=True)                # [1,1]
        out_ref[...] = contrib * jnp.float32(repetition_penalty)


def _vmem_capacity_bytes():
    """Generation-aware VMEM capacity; conservative fallback = v7x's 64 MiB."""
    try:
        info = pltpu.get_tpu_info()
        cap = int(getattr(info, "vmem_capacity_bytes", 0))
        if cap > 0:
            return cap
    except Exception:
        pass
    return 64 * 1024 * 1024


def _choose_tiling(T, V, n, itemsize, vmem_cap):
    """Pick a lane-dense vocab tile (and padded vocab) such that the
    double-buffered input tile plus the [Tn,Tn] epilogue temporaries fit the
    chip's VMEM.  Never falls back to a full-V tile."""
    tn = max(T - n + 1, 1)
    epilogue = 4 * tn * tn * 4               # ~four [Tn,Tn] 32-bit transients
    scratch = 3 * T * 128 * 4                # three [T,1] stats, lane-padded
    reserve = epilogue + scratch + (8 << 20)
    budget = max(vmem_cap - reserve, 4 << 20)

    v128 = ((V + 127) // 128) * 128
    tv = 128
    for cand in (2048, 1024, 512, 256, 128):
        if cand > v128:
            continue
        if 2 * T * cand * itemsize <= budget:
            tv = cand
            break
    tv = min(tv, v128)
    v_pad = V if V % tv == 0 else ((V + tv - 1) // tv) * tv

    need = (2 * T * tv * itemsize            # double-buffered input tile
            + 3 * T * tv * 4                 # in-loop f32 / iota / exp temps
            + epilogue + scratch + (4 << 20))
    vmem_limit = int(min(max(need, 32 << 20), max(vmem_cap - (4 << 20), 16 << 20)))
    return tv, v_pad, vmem_limit


def anti_pattern_loss(logits, targets=None, *, repetition_penalty=1.2,
                      ngram_size=3, cast_to_bf16=False):
    """Pallas implementation of AntiPatternLoss.forward.

    `targets` is unused by the reference forward and kept for signature
    parity.  `logits` may be float32 or bfloat16 (upcast happens per tile
    inside the kernel).  Set cast_to_bf16=True to halve HBM read bytes on the
    bandwidth-bound v5e/v6e (in-kernel math stays f32)."""
    B, T, V = logits.shape
    n = ngram_size
    if T < 2 * n:
        # No (t, t2) pair with t2 >= t + n can exist -> reference returns 0.0.
        return jnp.float32(0.0)

    if cast_to_bf16 and logits.dtype != jnp.bfloat16:
        logits = logits.astype(jnp.bfloat16)

    vmem_cap = _vmem_capacity_bytes()
    tv, v_pad, vmem_limit = _choose_tiling(T, V, n, logits.dtype.itemsize, vmem_cap)
    if v_pad != V:
        # Pad with the dtype's most-negative finite value: exact for
        # max / first-index argmax / sum-of-exp.
        pad_val = float(jnp.finfo(logits.dtype).min)
        logits = jnp.pad(logits, ((0, 0), (0, 0), (0, v_pad - V)),
                         constant_values=pad_val)
    nv = v_pad // tv

    kernel = functools.partial(
        _anti_pattern_kernel,
        ngram_size=n,
        repetition_penalty=repetition_penalty,
        v_tile=tv,
        vocab_pad=v_pad,
    )

    out = pl.pallas_call(
        kernel,
        out_shape=jax.ShapeDtypeStruct((B, 1, 1), jnp.float32),
        grid_spec=pltpu.PrefetchScalarGridSpec(
            num_scalar_prefetch=0,
            grid=(B, nv),
            in_specs=[pl.BlockSpec((None, T, tv), lambda b, v: (b, 0, v))],
            out_specs=pl.BlockSpec((None, 1, 1), lambda b, v: (b, 0, 0)),
            scratch_shapes=[
                pltpu.VMEM((T, 1), jnp.float32),   # running max
                pltpu.VMEM((T, 1), jnp.int32),     # running argmax (first-index)
                pltpu.VMEM((T, 1), jnp.float32),   # running rescaled sum-of-exp
            ],
        ),
        compiler_params=pltpu.CompilerParams(
            dimension_semantics=("parallel", "arbitrary"),
            vmem_limit_bytes=vmem_limit,
        ),
    )(logits)
    # PyTorch divides only when pattern_count > 0; the sum is 0 otherwise, so
    # always dividing is numerically identical.
    return jnp.sum(out) / jnp.float32(B * T)


def reference_loss(logits, ngram_size=3, repetition_penalty=1.2):
    """Pure numpy replica of the PyTorch loops, for validation."""
    logits = np.asarray(logits, dtype=np.float32)
    B, T, V = logits.shape
    pred = logits.argmax(-1)
    loss, count = 0.0, 0
    for b in range(B):
        for t in range(T - ngram_size + 1):
            ng1 = pred[b, t:t + ngram_size]
            for t2 in range(t + ngram_size, T - ngram_size + 1):
                ng2 = pred[b, t2:t2 + ngram_size]
                if np.array_equal(ng1, ng2):
                    count += 1
                    blk = logits[b, t2:t2 + ngram_size]
                    e = np.exp(blk - blk.max(-1, keepdims=True))
                    prob = e / e.sum(-1, keepdims=True)
                    pen = np.mean(prob[np.arange(ngram_size), ng2])
                    loss += pen * repetition_penalty
    if count > 0:
        loss = loss / (B * T)
    return float(loss)


if __name__ == "__main__":
    B, T, V = 2, 8, 32  # vocab_size=32, seq=8, batch=2; ngram_size=3, penalty=1.2
    key = jax.random.PRNGKey(0)
    k_noise, k_tgt = jax.random.split(key)

    # Periodic predicted-token pattern guarantees repeated 3-grams so the loss
    # exercises the non-trivial path; small noise keeps the argmax deterministic.
    tokens = (jnp.arange(T)[None, :] % 3 + jnp.arange(B)[:, None]) % V      # [B, T]
    noise = 0.1 * jax.random.normal(k_noise, (B, T, V), dtype=jnp.float32)
    logits = noise + 4.0 * jax.nn.one_hot(tokens, V, dtype=jnp.float32)     # [B, T, V]
    targets = jax.random.randint(k_tgt, (B, T), 0, V)                       # unused by forward

    loss = anti_pattern_loss(logits, targets, repetition_penalty=1.2, ngram_size=3)
    loss = jax.block_until_ready(loss)

    ref = reference_loss(np.asarray(logits), ngram_size=3, repetition_penalty=1.2)
    assert abs(float(loss) - ref) < 1e-5, (float(loss), ref)
    print("KERNEL_OK")
</pallas_src>

<mosaic_0001>
module attributes {stable_mosaic.version = 11 : i64} {
  func.func @_anti_pattern_kernel(%arg0: i32, %arg1: i32, %arg2: memref<1x8x128xf32, #tpu.memory_space<vmem>>, %arg3: memref<1x1x1xf32, #tpu.memory_space<vmem>>, %arg4: memref<8x1xf32, #tpu.memory_space<vmem>>, %arg5: memref<8x1xi32, #tpu.memory_space<vmem>>, %arg6: memref<8x1xf32, #tpu.memory_space<vmem>>) attributes {dimension_semantics = [#tpu.dimension_semantics<parallel>, #tpu.dimension_semantics<arbitrary>], iteration_bounds = array<i64: 2, 1>, scalar_prefetch = 0 : i64, scratch_operands = 3 : i64, tpu.core_type = #tpu.core_type<tc>, window_params = [{transform_indices = @transform_0, window_bounds = array<i64: 1, 8, 128>}, {transform_indices = @transform_1, window_bounds = array<i64: 1, 1, 1>}]} {
    %c0_i32 = arith.constant 0 : i32
    %0 = arith.cmpi eq, %arg1, %c0_i32 : i32
    %1 = arith.extui %0 : i1 to i32
    %c0_i32_0 = arith.constant 0 : i32
    %2 = arith.cmpi ne, %1, %c0_i32_0 : i32
    scf.if %2 {
      %cst_20 = arith.constant -3.40282347E+38 : f32
      %41 = vector.broadcast %cst_20 : f32 to vector<8x1xf32>
      %c0_21 = arith.constant 0 : index
      %c0_22 = arith.constant 0 : index
      %42 = vector.load %arg4[%c0_21, %c0_22] : memref<8x1xf32, #tpu.memory_space<vmem>>, vector<8x1xf32>
      tpu.vector_store %arg4[%c0_21, %c0_22], %41 {strides = array<i32>} : memref<8x1xf32, #tpu.memory_space<vmem>>, vector<8x1xf32>,
      %cst_23 = arith.constant 0.000000e+00 : f32
      %43 = vector.broadcast %cst_23 : f32 to vector<8x1xf32>
      %c0_24 = arith.constant 0 : index
      %c0_25 = arith.constant 0 : index
      %44 = vector.load %arg6[%c0_24, %c0_25] : memref<8x1xf32, #tpu.memory_space<vmem>>, vector<8x1xf32>
      tpu.vector_store %arg6[%c0_24, %c0_25], %43 {strides = array<i32>} : memref<8x1xf32, #tpu.memory_space<vmem>>, vector<8x1xf32>,
      %c0_i32_26 = arith.constant 0 : i32
      %45 = vector.broadcast %c0_i32_26 : i32 to vector<8x1xi32>
      %c0_27 = arith.constant 0 : index
      %c0_28 = arith.constant 0 : index
      %46 = vector.load %arg5[%c0_27, %c0_28] : memref<8x1xi32, #tpu.memory_space<vmem>>, vector<8x1xi32>
      tpu.vector_store %arg5[%c0_27, %c0_28], %45 {strides = array<i32>} : memref<8x1xi32, #tpu.memory_space<vmem>>, vector<8x1xi32>,
    } else {
    }
    %c0 = arith.constant 0 : index
    %c0_1 = arith.constant 0 : index
    %c0_2 = arith.constant 0 : index
    %3 = vector.load %arg2[%c0, %c0_1, %c0_2] : memref<1x8x128xf32, #tpu.memory_space<vmem>>, vector<1x8x128xf32>
    %4 = vector.shape_cast %3 : vector<1x8x128xf32> to vector<8x128xf32>
    %5 = tpu.iota {dimensions = array<i32: 1>} : vector<8x128xi32>
    %c128_i32 = arith.constant 128 : i32
    %6 = arith.muli %arg1, %c128_i32 : i32
    %7 = vector.broadcast %6 : i32 to vector<8x128xi32>
    %8 = arith.addi %5, %7 : vector<8x128xi32>
    %cst = arith.constant dense<0xFF800000> : vector<8xf32>
    %9 = vector.multi_reduction <maximumf>, %4, %cst [1] : vector<8x128xf32> to vector<8xf32>
    %10 = vector.shape_cast %9 : vector<8xf32> to vector<8x1xf32>
    %11 = vector.broadcast %10 : vector<8x1xf32> to vector<8x128xf32>
    %12 = arith.cmpf oeq, %4, %11 : vector<8x128xf32>
    %c128_i32_3 = arith.constant 128 : i32
    %13 = vector.broadcast %c128_i32_3 : i32 to vector<8x128xi32>
    %14 = arith.select %12, %8, %13 : vector<8x128xi1>, vector<8x128xi32>
    %cst_4 = arith.constant dense<2147483647> : vector<8xi32>
    %15 = vector.multi_reduction <minsi>, %14, %cst_4 [1] : vector<8x128xi32> to vector<8xi32>
    %16 = vector.shape_cast %15 : vector<8xi32> to vector<8x1xi32>
    %17 = vector.broadcast %10 : vector<8x1xf32> to vector<8x128xf32>
    %18 = arith.subf %4, %17 : vector<8x128xf32>
    %19 = math.exp %18 : vector<8x128xf32>
    %cst_5 = arith.constant dense<0.000000e+00> : vector<8xf32>
    %20 = vector.multi_reduction <add>, %19, %cst_5 [1] : vector<8x128xf32> to vector<8xf32>
    %21 = vector.shape_cast %20 : vector<8xf32> to vector<8x1xf32>
    %c0_6 = arith.constant 0 : index
    %c0_7 = arith.constant 0 : index
    %22 = vector.load %arg4[%c0_6, %c0_7] : memref<8x1xf32, #tpu.memory_space<vmem>>, vector<8x1xf32>
    %23 = arith.maximumf %22, %10 : vector<8x1xf32>
    %24 = arith.cmpf ogt, %10, %22 : vector<8x1xf32>
    %c0_8 = arith.constant 0 : index
    %c0_9 = arith.constant 0 : index
    %25 = vector.load %arg5[%c0_8, %c0_9] : memref<8x1xi32, #tpu.memory_space<vmem>>, vector<8x1xi32>
    %26 = arith.select %24, %16, %25 : vector<8x1xi1>, vector<8x1xi32>
    %c0_10 = arith.constant 0 : index
    %c0_11 = arith.constant 0 : index
    %27 = vector.load %arg5[%c0_10, %c0_11] : memref<8x1xi32, #tpu.memory_space<vmem>>, vector<8x1xi32>
    tpu.vector_store %arg5[%c0_10, %c0_11], %26 {strides = array<i32>} : memref<8x1xi32, #tpu.memory_space<vmem>>, vector<8x1xi32>,
    %c0_12 = arith.constant 0 : index
    %c0_13 = arith.constant 0 : index
    %28 = vector.load %arg6[%c0_12, %c0_13] : memref<8x1xf32, #tpu.memory_space<vmem>>, vector<8x1xf32>
    %29 = arith.subf %22, %23 : vector<8x1xf32>
    %30 = math.exp %29 : vector<8x1xf32>
    %31 = arith.mulf %28, %30 : vector<8x1xf32>
    %32 = arith.subf %10, %23 : vector<8x1xf32>
    %33 = math.exp %32 : vector<8x1xf32>
    %34 = arith.mulf %21, %33 : vector<8x1xf32>
    %35 = arith.addf %31, %34 : vector<8x1xf32>
    %c0_14 = arith.constant 0 : index
    %c0_15 = arith.constant 0 : index
    %36 = vector.load %arg6[%c0_14, %c0_15] : memref<8x1xf32, #tpu.memory_space<vmem>>, vector<8x1xf32>
    tpu.vector_store %arg6[%c0_14, %c0_15], %35 {strides = array<i32>} : memref<8x1xf32, #tpu.memory_space<vmem>>, vector<8x1xf32>,
    %c0_16 = arith.constant 0 : index
    %c0_17 = arith.constant 0 : index
    %37 = vector.load %arg4[%c0_16, %c0_17] : memref<8x1xf32, #tpu.memory_space<vmem>>, vector<8x1xf32>
    tpu.vector_store %arg4[%c0_16, %c0_17], %23 {strides = array<i32>} : memref<8x1xf32, #tpu.memory_space<vmem>>, vector<8x1xf32>,
    %c0_i32_18 = arith.constant 0 : i32
    %38 = arith.cmpi eq, %arg1, %c0_i32_18 : i32
    %39 = arith.extui %38 : i1 to i32
    %c0_i32_19 = arith.constant 0 : i32
    %40 = arith.cmpi ne, %39, %c0_i32_19 : i32
    scf.if %40 {
      %c0_20 = arith.constant 0 : index
      %c0_21 = arith.constant 0 : index
      %41 = vector.load %arg6[%c0_20, %c0_21] : memref<8x1xf32, #tpu.memory_space<vmem>>, vector<8x1xf32>
      %cst_22 = arith.constant 1.000000e+00 : f32
      %42 = vector.broadcast %cst_22 : f32 to vector<8x1xf32>
      %43 = arith.divf %42, %41 : vector<8x1xf32>
      %c0_23 = arith.constant 0 : index
      %c0_24 = arith.constant 0 : index
      %44 = vector.load %arg5[%c0_23, %c0_24] : memref<8x1xi32, #tpu.memory_space<vmem>>, vector<8x1xi32>
      %45 = vector.shape_cast %44 : vector<8x1xi32> to vector<8x1xi32>
      %46 = vector.broadcast %45 : vector<8x1xi32> to vector<8x128xi32>
      %47 = tpu.transpose %46, [1, 0] : vector<8x128xi32> -> vector<128x8xi32>
      %48 = vector.extract_strided_slice %47 {offsets = [0, 0], sizes = [1, 8], strides = [1, 1]} : vector<128x8xi32> to vector<1x8xi32>
      %49 = vector.extract_strided_slice %44 {offsets = [0, 0], sizes = [6, 1], strides = [1, 1]} : vector<8x1xi32> to vector<6x1xi32>
      %50 = vector.extract_strided_slice %48 {offsets = [0, 0], sizes = [1, 6], strides = [1, 1]} : vector<1x8xi32> to vector<1x6xi32>
      %51 = vector.broadcast %49 : vector<6x1xi32> to vector<6x6xi32>
      %52 = vector.broadcast %50 : vector<1x6xi32> to vector<6x6xi32>
      %53 = arith.cmpi eq, %51, %52 : vector<6x6xi32>
      %54 = vector.extract_strided_slice %44 {offsets = [1, 0], sizes = [6, 1], strides = [1, 1]} : vector<8x1xi32> to vector<6x1xi32>
      %55 = vector.extract_strided_slice %48 {offsets = [0, 1], sizes = [1, 6], strides = [1, 1]} : vector<1x8xi32> to vector<1x6xi32>
      %56 = vector.broadcast %54 : vector<6x1xi32> to vector<6x6xi32>
      %57 = vector.broadcast %55 : vector<1x6xi32> to vector<6x6xi32>
      %58 = arith.cmpi eq, %56, %57 : vector<6x6xi32>
      %59 = arith.andi %53, %58 : vector<6x6xi1>
      %60 = vector.extract_strided_slice %44 {offsets = [2, 0], sizes = [6, 1], strides = [1, 1]} : vector<8x1xi32> to vector<6x1xi32>
      %61 = vector.extract_strided_slice %48 {offsets = [0, 2], sizes = [1, 6], strides = [1, 1]} : vector<1x8xi32> to vector<1x6xi32>
      %62 = vector.broadcast %60 : vector<6x1xi32> to vector<6x6xi32>
      %63 = vector.broadcast %61 : vector<1x6xi32> to vector<6x6xi32>
      %64 = arith.cmpi eq, %62, %63 : vector<6x6xi32>
      %65 = arith.andi %59, %64 : vector<6x6xi1>
      %66 = vector.extract_strided_slice %43 {offsets = [0, 0], sizes = [6, 1], strides = [1, 1]} : vector<8x1xf32> to vector<6x1xf32>
      %67 = vector.extract_strided_slice %43 {offsets = [1, 0], sizes = [6, 1], strides = [1, 1]} : vector<8x1xf32> to vector<6x1xf32>
      %68 = arith.addf %66, %67 : vector<6x1xf32>
      %69 = vector.extract_strided_slice %43 {offsets = [2, 0], sizes = [6, 1], strides = [1, 1]} : vector<8x1xf32> to vector<6x1xf32>
      %70 = arith.addf %68, %69 : vector<6x1xf32>
      %cst_25 = arith.constant 0.333333343 : f32
      %71 = vector.broadcast %cst_25 : f32 to vector<6x1xf32>
      %72 = arith.mulf %70, %71 : vector<6x1xf32>
      %73 = tpu.iota {dimensions = array<i32: 0>} : vector<6x1xi32>
      %74 = tpu.iota {dimensions = array<i32: 1>} : vector<1x6xi32>
      %c3_i32 = arith.constant 3 : i32
      %75 = vector.broadcast %c3_i32 : i32 to vector<1x6xi32>
      %76 = arith.addi %74, %75 : vector<1x6xi32>
      %77 = vector.broadcast %73 : vector<6x1xi32> to vector<6x6xi32>
      %78 = vector.broadcast %76 : vector<1x6xi32> to vector<6x6xi32>
      %79 = arith.cmpi sge, %77, %78 : vector<6x6xi32>
      %80 = arith.andi %65, %79 : vector<6x6xi1>
      %81 = arith.extui %80 : vector<6x6xi1> to vector<6x6xi32>
      %82 = arith.sitofp %81 : vector<6x6xi32> to vector<6x6xf32>
      %cst_26 = arith.constant dense<0.000000e+00> : vector<6xf32>
      %83 = vector.multi_reduction <add>, %82, %cst_26 [1] : vector<6x6xf32> to vector<6xf32>
      %84 = vector.shape_cast %83 : vector<6xf32> to vector<6x1xf32>
      %85 = arith.mulf %84, %72 : vector<6x1xf32>
      %cst_27 = arith.constant dense<0.000000e+00> : vector<1xf32>
      %86 = vector.multi_reduction <add>, %85, %cst_27 [0] : vector<6x1xf32> to vector<1xf32>
      %87 = vector.shape_cast %86 : vector<1xf32> to vector<1x1xf32>
      %cst_28 = arith.constant 1.200000e+00 : f32
      %88 = vector.broadcast %cst_28 : f32 to vector<1x1xf32>
      %89 = arith.mulf %87, %88 : vector<1x1xf32>
      %c0_29 = arith.constant 0 : index
      %c0_30 = arith.constant 0 : index
      %c0_31 = arith.constant 0 : index
      %90 = vector.load %arg3[%c0_29, %c0_30, %c0_31] : memref<1x1x1xf32, #tpu.memory_space<vmem>>, vector<1x1x1xf32>
      %91 = vector.shape_cast %90 : vector<1x1x1xf32> to vector<1x1xf32>
      %92 = vector.shape_cast %89 : vector<1x1xf32> to vector<1x1x1xf32>
      tpu.vector_store %arg3[%c0_29, %c0_30, %c0_31], %92 {strides = array<i32>} : memref<1x1x1xf32, #tpu.memory_space<vmem>>, vector<1x1x1xf32>,
    } else {
    }
    return
  }
  func.func @transform_0(%arg0: i32, %arg1: i32) -> (i32, i32, i32) {
    %c0_i32 = arith.constant 0 : i32
    %c0_i32_0 = arith.constant 0 : i32
    return %arg0, %c0_i32, %arg1 : i32, i32, i32
  }
  func.func @transform_1(%arg0: i32, %arg1: i32) -> (i32, i32, i32) {
    %c0_i32 = arith.constant 0 : i32
    %c0_i32_0 = arith.constant 0 : i32
    %c0_i32_1 = arith.constant 0 : i32
    return %arg0, %c0_i32, %c0_i32_0 : i32, i32, i32
  }
}

</mosaic_0001>

<llo_original>
// kernel: tpu_custom_call.1
$region0: #{tpu_custom_call.1}
  #allocation0 [shape = 'u32[]', space=smem, size = 0x4, offset = 0x4, fixed_abs, tag = 'smem constant byte address 0x4 - core index']
  #allocation1 [shape = 'u32[72,128]{1,0:T(1,128)}', space=vmem, size = 0x9000, scoped, tag = 'internal scratch']
  #allocation2 [shape = 'f32[8,1]{1,0:T(8,128)}', space=vmem, size = 0x1000, scoped, tag = 'scratch operand']
  #allocation3 [shape = 's32[8,1]{1,0:T(8,128)}', space=vmem, size = 0x1000, scoped, tag = 'scratch operand']
  #allocation4 [shape = 'f32[8,1]{1,0:T(8,128)}', space=vmem, size = 0x1000, scoped, tag = 'scratch operand']
  %s0 = inlined_call_operand.hbm [shape: f32[2,8,128], index: 0, kind: input, shape index: {}]
  %s1 = inlined_call_operand.vmem [shape: f32[2,1,1], index: 1, kind: output, shape index: {}]
  %s2 = sld [smem:[#allocation0]]
  $region49: #{tpu_custom_call.1} parent=0
    _
  %s4 = ssub.s32 1, %s2
  %s5 = scalar_select 0, %s4, %s2
  $region1: #{tpu_custom_call.1} parent=0
    #allocation5 [shape = 'u8[8192]{0}', space=vmem, size = 0x2000, scoped, tag = 'input window, operand 0']
    #allocation6 [shape = 's32[2]{0}', space=sflag, size = 0x8, scoped, tag = 'scoped memory for tpu_custom_call.1']
    %6 = vsyncpa [#allocation6], 0
    %s7 = scalar_lea.sflag [#allocation6], 1
    %8 = vsyncpa %s7, 0
    loop: start=0, step=1, limit=4
    $region2: #{tpu_custom_call.1} parent=1 // loop_pre_header
      _
    $region3: #{tpu_custom_call.1} parent=1 // loop_header
      %s10 = sphi 0, %s14
      %p11 = scmp.ge.s32.totalorder %s10, 4
      %s17 = sphi 0, %s29
      %s18 = sphi 0, %s25
      %s19 = sphi 0, %s17
      %s20 = sphi 0, %s18
      %s21 = sphi 0, %s19
      %s22 = sphi 0, %s20
      %s34 = sphi 0, %s36
      %s37 = sphi 0, %s34
      %s38 = sphi 0, %s37
      %s54 = sphi 0, %s38
      %s60 = sphi 0, %s62
      %s63 = sphi 0, %s60
      %s64 = sphi 0, %s63
      %s80 = sphi 0, %s64
    $region4: #{tpu_custom_call.1} parent=1 // loop_header_branch
      %13 = sbr.rel (%p11) target = $region8
    $region5: #{tpu_custom_call.1} parent=1 // loop_body
      %s15 = ssub.s32 %s10, 1
      %s16 = ssub.s32 %s10, 2
      %s23 = sadd.s32 1, %s18
      %p24 = scmp.ge.s32.totalorder %s23, 1
      %s25 = scalar_select %p24, 0, %s23
      %s26 = sadd.s32 1, %s17
      %s27 = scalar_select %p24, %s26, %s17
      %p28 = scmp.ge.s32.totalorder %s27, 2
      %s29 = scalar_select %p28, 0, %s27
      %s30 = ssub.s32 %s17, %s29
      %s31 = ssub.s32 %s18, %s25
      %s32 = sor.u32 %s30, %s31
      %p33 = scmp.eq.s32.totalorder %s32, 0
      %s35 = sadd.s32 %s34, 1
      %s36 = scalar_select %p33, %s34, %s35
      %p39 = pneg %p33
      %p40 = scmp.eq.s32.totalorder %s10, 1
      %p41 = por %p39, %p40
      %p42 = scmp.ne.s32.totalorder %s34, %s37
      %p43 = scmp.eq.s32.totalorder %s10, 0
      %p44 = por %p42, %p43
      %p45 = scmp.ne.s32.totalorder %s34, %s37
      %p46 = scmp.eq.s32.totalorder %s15, 1
      %p47 = por %p45, %p46
      %p48 = scmp.ne.s32.totalorder %s37, %s38
      %p49 = scmp.eq.s32.totalorder %s15, 0
      %p50 = por %p48, %p49
      %p51 = scmp.ne.s32.totalorder %s37, %s38
      %p52 = scmp.eq.s32.totalorder %s16, 1
      %p53 = por %p51, %p52
      %p55 = scmp.ne.s32.totalorder %s38, %s54
      %p56 = scmp.eq.s32.totalorder %s16, 0
      %p57 = por %p55, %p56
      %s58 = ssub.s32 %s17, %s29
      %p59 = scmp.eq.s32.totalorder %s58, 0
      %s61 = sadd.s32 %s60, 1
      %s62 = scalar_select %p59, %s60, %s61
      %p65 = pneg %p59
      %p66 = scmp.eq.s32.totalorder %s10, 1
      %p67 = por %p65, %p66
      %p68 = scmp.ne.s32.totalorder %s60, %s63
      %p69 = scmp.eq.s32.totalorder %s10, 0
      %p70 = por %p68, %p69
      %p71 = scmp.ne.s32.totalorder %s60, %s63
      %p72 = scmp.eq.s32.totalorder %s15, 1
      %p73 = por %p71, %p72
      %p74 = scmp.ne.s32.totalorder %s63, %s64
      %p75 = scmp.eq.s32.totalorder %s15, 0
      %p76 = por %p74, %p75
      %p77 = scmp.ne.s32.totalorder %s63, %s64
      %p78 = scmp.eq.s32.totalorder %s16, 1
      %p79 = por %p77, %p78
      %p81 = scmp.ne.s32.totalorder %s64, %s80
      %p82 = scmp.eq.s32.totalorder %s16, 0
      %p83 = por %p81, %p82
      %p84 = scmp.le.s32.totalorder 1, %s10
      %p85 = scmp.lt.s32.totalorder %s10, 3
      %p86 = pnand %p84, %p85
      %p87 = pneg %p86
      // Predicated region
      $region9: #{tpu_custom_call.1} parent=5 // pred_check
        _
      $region10: #{tpu_custom_call.1} parent=5 // pred_check_branch
        %89 = sbr.rel (%p86) target = $region12
      $region11: #{tpu_custom_call.1} parent=5 // pred_region
        %s90 = ssub.s32 %s10, 1
      $region12: #{tpu_custom_call.1} parent=5 // pred_fallthru
        _
      %p91 = scmp.lt.s32.totalorder %s10, 2
      // Predicated region
      $region13: #{tpu_custom_call.1} parent=5 // pred_check
        %p92 = pneg %p91
      $region14: #{tpu_custom_call.1} parent=5 // pred_check_branch
        %94 = sbr.rel (%p92) target = $region16
      $region15: #{tpu_custom_call.1} parent=5 // pred_region
        // Predicated region
        $region17: #{tpu_custom_call.1} parent=15 // pred_check
          %p95 = pneg %p44
        $region18: #{tpu_custom_call.1} parent=15 // pred_check_branch
          %97 = sbr.rel (%p95) target = $region20
        $region19: #{tpu_custom_call.1} parent=15 // pred_region
          %s98 = sand.u32 %s34, 1
          %s99 = scalar_lea.sflag [#allocation6], %s98
          %s100 = sand.u32 %s34, 1
          %s101 = smul.addr %s100, 8
          %s102 = scalar_lea.vmem [#allocation5], %s101
          %104 = vsyncadd %s99, 0
          %s105 = sadd.s32 %s18, %s17
          %s106 = smul.addr %s105, 8
          %s107 = scalar_lea.hbm %s0, %s106
          %s109 = sshll.u32 %s107, 4
          %s110 = int_to_ptr.hbm [resolvable:$true] %s109
          %s111 = sshll.u32 %s102, 4
          %s112 = int_to_ptr.vmem [resolvable:$true] %s111
          %114 = dma.hbm_to_vmem [thread:$0]  %s110, 128, %s112, %s99
        $region20: #{tpu_custom_call.1} parent=15 // pred_fallthru
          _
      $region16: #{tpu_custom_call.1} parent=5 // pred_fallthru
        _
      %p115 = scmp.le.s32.totalorder 1, %s10
      %p116 = scmp.lt.s32.totalorder %s10, 3
      %p117 = pnand %p115, %p116
      %p118 = pneg %p117
      // Predicated region
      $region21: #{tpu_custom_call.1} parent=5 // pred_check
        _
      $region22: #{tpu_custom_call.1} parent=5 // pred_check_branch
        %120 = sbr.rel (%p117) target = $region24
      $region23: #{tpu_custom_call.1} parent=5 // pred_region
        %s121 = ssub.s32 %s10, 1
        %s122 = sand.u32 %s37, 1
        %s123 = scalar_lea.sflag [#allocation6], %s122
        %s124 = sand.u32 %s37, 1
        %s125 = smul.addr %s124, 8
        %s126 = scalar_lea.vmem [#allocation5], %s125
        // Predicated region
        $region25: #{tpu_custom_call.1} parent=23 // pred_check
          %p127 = pneg %p50
        $region26: #{tpu_custom_call.1} parent=23 // pred_check_branch
          %129 = sbr.rel (%p127) target = $region28
        $region27: #{tpu_custom_call.1} parent=23 // pred_region
          %131 = dma.done %s123, 128
        $region28: #{tpu_custom_call.1} parent=23 // pred_fallthru
          _
        %s132 = sand.u32 %s37, 1
        %s133 = scalar_lea.sflag [#allocation6], %s132
        %s134 = sand.u32 %s37, 1
        %s135 = smul.addr %s134, 8
        %s136 = scalar_lea.vmem [#allocation5], %s135
        %p137 = pneg %p50
        %p138 = pneg %p47
        %p139 = pneg %p76
        %p140 = pneg %p73
        %p141 = scmp.lt.s32.totalorder %s19, 1
        %s142 = scalar_select %p141, %s19, 1
        %s143 = scalar_lea.vmem %s1, %s142
        %p144 = scmp.lt.s32.totalorder %s19, 1
        %s145 = scalar_select %p144, %s19, 1
        %s146 = scalar_lea.vmem %s1, %s145
        %p147 = scmp.eq.s32.totalorder %s20, 0
        // Predicated region
        $region29: #{tpu_custom_call.1} parent=23 // pred_check
          %p148 = pneg %p147
        $region30: #{tpu_custom_call.1} parent=23 // pred_check_branch
          %150 = sbr.rel (%p148) target = $region32
        $region31: #{tpu_custom_call.1} parent=23 // pred_region
          %vm151 = vcmask 7168
          %152 = vst.msk [vmem:[#allocation2] sm:$0xff] %vm151, -3.4028235e+38
          %153 = vst.msk [vmem:[#allocation4] sm:$0xff] %vm151, 0.0
          %154 = vst.msk [vmem:[#allocation3] sm:$0xff] %vm151, 0
        $region32: #{tpu_custom_call.1} parent=23 // pred_fallthru
          _
        %v155 = vld [vmem:[%s126] sm:$0xff]
        %v156 = vlaneseq
        %v157 = vand.u32 %v156, 127
        %s158 = smul.u32 %s20, 128
        %v159 = vstv %s158
        %v160 = vadd.s32 %v157, %v159
        %161 = vmax.xlane.f32.xlu0 %v155
        %v162 = vpop.xlane.xlu0 %161
        %vm163 = vcmp.eq.f32.partialorder %v155, %v162
        %v164 = vsel %vm163, %v160, 128
        %v165 = vand.u32 %v164, 65535
        %v166 = vshra.s32 %v164, 16
        %v167 = vcvt.s32.f32 %v165
        %v168 = vcvt.s32.f32 %v166
        %169 = vmin.xlane.f32.xlu0 %v168
        %v170 = vpop.xlane.xlu0 %169
        %vm171 = vcmp.eq.f32.partialorder %v168, %v170
        %v172 = vsel %vm171, %v167, inf
        %173 = vmin.xlane.f32.xlu0 %v172
        %v174 = vpop.xlane.xlu0 %173
        %v175 = vcvt.f32.s32 %v174
        %v176 = vcvt.f32.s32 %v170
        %v177 = vshll.u32 %v176, 16
        %v178 = vadd.s32 %v177, %v175
        %v179 = vsub.f32 %v155, %v162
        %v180 = vmul.f32 %v179, 1.442695
        %v181 = vpow.pop %v180
        %182 = vadd.xlane.f32.xlu0 %v181
        %v183 = vpop.xlane.xlu0 %182
        %v184 = vld [vmem:[#allocation2] sm:$0xff]
        %v185 = vmax.f32 %v184, %v162
        %vm186 = vcmp.gt.f32.partialorder %v162, %v184
        %v187 = vld [vmem:[#allocation3] sm:$0xff]
        %v188 = vsel %vm186, %v178, %v187
        %vm189 = vcmask 7168
        %190 = vst.msk [vmem:[#allocation3] sm:$0xff] %vm189, %v188
        %v191 = vld [vmem:[#allocation4] sm:$0xff]
        %v192 = vsub.f32 %v184, %v185
        %v193 = vmul.f32 %v192, 1.442695
        %v194 = vpow.pop %v193
        %v195 = vmul.f32 %v191, %v194
        %v196 = vsub.f32 %v162, %v185
        %v197 = vmul.f32 %v196, 1.442695
        %v198 = vpow.pop %v197
        %v199 = vmul.f32 %v183, %v198
        %v200 = vadd.f32 %v195, %v199
        %201 = vst.msk [vmem:[#allocation4] sm:$0xff] %vm189, %v200
        %202 = vst.msk [vmem:[#allocation2] sm:$0xff] %vm189, %v185
        // Predicated region
        $region33: #{tpu_custom_call.1} parent=23 // pred_check
          %p203 = pneg %p147
        $region34: #{tpu_custom_call.1} parent=23 // pred_check_branch
          %205 = sbr.rel (%p203) target = $region36
        $region35: #{tpu_custom_call.1} parent=23 // pred_region
          %v206 = vld [vmem:[#allocation4] sm:$0xff]
          %v207 = vrcp.pop %v206
          %v208 = vmul.f32 %v206, %v207
          %v209 = vsub.f32 1.0, %v208
          %v210 = vmul.f32 %v207, %v209
          %v211 = vadd.f32 %v207, %v210
          %vm212 = vweird.f32 %v206
          %vm213 = vweird.f32 %v207
          %vm214 = vmor %vm212, %vm213
          %v215 = vsel %vm214, %v207, %v211
          %v216 = vand.u32 2147483647, %v206
          %vm217 = vcmp.eq.f32.partialorder %v216, 8.507059e+37
          %v218 = vand.u32 %v206, 2147483648
          %v219 = vor.u32 1.1754944e-38, %v218
          %v220 = vsel %vm217, %v219, %v215
          %v221 = vmul.f32 1.0, %v220
          %v222 = vld [vmem:[#allocation3] sm:$0xff]
          %223 = vset.pattern.permute.xlu0 0
          %224 = vperm.xlu0 %223, %v222
          %v225 = vpop.permute.xlu0 %224
          %226 = vxpose.xlu0.b32.start [1/16] %v225, 128
          %227 = vxpose.xlu0.b32.cont [2/16] 0, 128
          %228 = vxpose.xlu0.b32.cont [3/16] 0, 128
          %229 = vxpose.xlu0.b32.cont [4/16] 0, 128
          %230 = vxpose.xlu0.b32.cont [5/16] 0, 128
          %231 = vxpose.xlu0.b32.cont [6/16] 0, 128
          %232 = vxpose.xlu0.b32.cont [7/16] 0, 128
          %233 = vxpose.xlu0.b32.cont [8/16] 0, 128
          %234 = vxpose.xlu0.b32.cont [9/16] 0, 128
          %235 = vxpose.xlu0.b32.cont [10/16] 0, 128
          %236 = vxpose.xlu0.b32.cont [11/16] 0, 128
          %237 = vxpose.xlu0.b32.cont [12/16] 0, 128
          %238 = vxpose.xlu0.b32.cont [13/16] 0, 128
          %239 = vxpose.xlu0.b32.cont [14/16] 0, 128
          %240 = vxpose.xlu0.b32.cont [15/16] 0, 128
          %241 = vxpose.xlu0.b32.end [16/16] 0, 128
          %v242 = vpop.trf.xlu0
          %v243 = vpop.trf.xlu0
          %v244 = vpop.trf.xlu0
          %v245 = vpop.trf.xlu0
          %v246 = vpop.trf.xlu0
          %v247 = vpop.trf.xlu0
          %v248 = vpop.trf.xlu0
          %v249 = vpop.trf.xlu0
          %v250 = vpop.trf.xlu0
          %v251 = vpop.trf.xlu0
          %v252 = vpop.trf.xlu0
          %v253 = vpop.trf.xlu0
          %v254 = vpop.trf.xlu0
          %v255 = vpop.trf.xlu0
          %v256 = vpop.trf.xlu0
          %v257 = vpop.trf.xlu0
          %v258 = vperm.slane %v242, 0
          %vm259 = vcmp.eq.s32.totalorder %v225, %v258
          %v260 = vsel %vm259, 1, 0
          %v261 = vrot.slane %v260, 1
          %262 = vrot.lane.b32.xlu0 %v261, 127
          %v263 = vpop.permute.xlu0 %262
          %vm264 = vcmp.ne.s32.totalorder %v263, 0
          %vm265 = vmand %vm259, %vm264
          %v266 = vrot.slane %v260, 2
          %267 = vrot.lane.b32.xlu0 %v266, 126
          %v268 = vpop.permute.xlu0 %267
          %vm269 = vcmp.ne.s32.totalorder %v268, 0
          %vm270 = vmand %vm265, %vm269
          %v272 = vrot.slane %v221, 1
          %v274 = vadd.f32 %v221, %v272
          %v275 = vrot.slane %v221, 2
          %v277 = vadd.f32 %v274, %v275
          %v278 = vmul.f32 %v277, 0.33333334
          %v279 = vlaneseq
          %v280 = vshrl.u32 %v279, 7
          %v281 = vadd.s32 %v157, 3
          %vm282 = vcmp.ge.s32.totalorder %v280, %v281
          %vm283 = vmand %vm270, %vm282
          %v284 = vsel %vm283, 1, 0
          %v285 = vcvt.s32.f32 %v284
          %vm286 = vcmask 46080
          %v287 = vsel %vm286, %v285, 0.0
          %288 = vadd.xlane.f32.xlu0 %v287
          %v289 = vpop.xlane.xlu0 %288
          %v290 = vmul.f32 %v289, %v278
          %vm291 = vcmask 5120
          %v292 = vsel %vm291, %v290, 0.0
          %v293 = vrot.slane %v292, 4
          %v294 = vadd.f32 %v292, %v293
          %v295 = vrot.slane %v294, 2
          %v296 = vadd.f32 %v294, %v295
          %v297 = vrot.slane %v296, 1
          %v298 = vadd.f32 %v296, %v297
          %v299 = vmul.f32 %v298, 1.2
          %vm300 = vcmask 0
          %301 = vst.msk [vmem:[%s146] sm:$0x1] %vm300, %v299
        $region36: #{tpu_custom_call.1} parent=23 // pred_fallthru
          _
        %p302 = scmp.lt.s32.totalorder %s19, 1
        %s303 = scalar_select %p302, %s19, 1
        %s304 = scalar_lea.vmem %s1, %s303
        // Predicated region
        $region37: #{tpu_custom_call.1} parent=23 // pred_check
          %p305 = pneg %p73
        $region38: #{tpu_custom_call.1} parent=23 // pred_check_branch
          %307 = sbr.rel (%p305) target = $region40
        $region39: #{tpu_custom_call.1} parent=23 // pred_region
          _
        $region40: #{tpu_custom_call.1} parent=23 // pred_fallthru
          _
      $region24: #{tpu_custom_call.1} parent=5 // pred_fallthru
        _
      %p308 = scmp.le.s32.totalorder 2, %s10
      // Predicated region
      $region41: #{tpu_custom_call.1} parent=5 // pred_check
        %p309 = pneg %p308
      $region42: #{tpu_custom_call.1} parent=5 // pred_check_branch
        %311 = sbr.rel (%p309) target = $region44
      $region43: #{tpu_custom_call.1} parent=5 // pred_region
        %s312 = ssub.s32 %s10, 2
        // Predicated region
        $region45: #{tpu_custom_call.1} parent=43 // pred_check
          %p313 = pneg %p79
        $region46: #{tpu_custom_call.1} parent=43 // pred_check_branch
          %315 = sbr.rel (%p313) target = $region48
        $region47: #{tpu_custom_call.1} parent=43 // pred_region
          %p316 = scmp.lt.s32.totalorder %s21, 1
          %s317 = scalar_select %p316, %s21, 1
          %s318 = scalar_lea.vmem %s1, %s317
        $region48: #{tpu_custom_call.1} parent=43 // pred_fallthru
          _
      $region44: #{tpu_custom_call.1} parent=5 // pred_fallthru
        _
    $region6: #{tpu_custom_call.1} parent=1 // loop_footer
      %s14 = sadd.s32 1, %s10
    $region7: #{tpu_custom_call.1} parent=1 // loop_footer_branch
      %9 = sbr.rel target = $region3
    $region8: #{tpu_custom_call.1} parent=1 // loop_exit
      _
    %319 = vsyncpa [#allocation6], 1
    %s320 = scalar_lea.sflag [#allocation6], 1
    %321 = vsyncpa %s320, 1

</llo_original>
